<compile_context>
chip_gen: v7x
topology: tpu7x:2x2x1
jax: 0.10.0
libtpu: 0.0.40
codegen_flags: <defaults>
</compile_context>

<pallas_src>
import functools

import jax
import jax.numpy as jnp
from jax.experimental import pallas as pl
from jax.experimental.pallas import tpu as pltpu

_LANES = 128
_MAX_TILE_ROWS = 1024   # 1024 x 128 f32 = 512 KiB per tile buffer


def _scale_kernel(x_ref, s_ref, *, scale_factor):
    """Accumulate the global sum(|x|) in SMEM; last step writes s = sum * scale_factor."""
    @pl.when(pl.program_id(0) == 0)
    def _init():
        s_ref[0, 0] = jnp.float32(0.0)

    s_ref[0, 0] += jnp.sum(jnp.abs(x_ref[...]))

    @pl.when(pl.program_id(0) == pl.num_programs(0) - 1)
    def _finalize():
        s_ref[0, 0] = s_ref[0, 0] * jnp.float32(scale_factor)


def _apply_kernel(s_ref, x_ref, o_ref, *, qn, qp):
    """vhat = round(clip(x * (1/s), Qn, Qp)) * s  (scalar reciprocal hoisted)."""
    s = s_ref[0, 0]
    inv_s = jnp.float32(1.0) / s          # one scalar divide per tile, not per element
    v = jnp.clip(x_ref[...] * inv_s, jnp.float32(qn), jnp.float32(qp))
    o_ref[...] = jnp.round(v) * s


@functools.partial(jax.jit, static_argnames=("p", "is_act"))
def quantizer_forward(v, p=4, is_act=False):
    """LSQ quantizer forward (first call, s initialised from the input).

    Returns (vhat, s) — the module also stores s as a parameter on first forward.
    """
    if is_act:
        qn, qp = 0, 2 ** p - 1
    else:
        qn, qp = -(2 ** (p - 1)), 2 ** (p - 1) - 1

    orig_shape = v.shape
    n_elem = v.size
    x = v.reshape(-1).astype(jnp.float32)

    # Lane-dense 2-D slab, zero-padded to a whole number of (tile_rows, 128) tiles.
    rows = pl.cdiv(n_elem, _LANES)
    rows8 = pl.cdiv(rows, 8) * 8
    tile_rows = min(rows8, _MAX_TILE_ROWS)
    num_tiles = pl.cdiv(rows8, tile_rows)
    rows_padded = num_tiles * tile_rows
    padded = rows_padded * _LANES
    if padded != n_elem:
        x = jnp.pad(x, (0, padded - n_elem))
    x2d = x.reshape(rows_padded, _LANES)

    # ---- Pass 1: global abs-sum -> step size s (sequential accumulation) ----
    scale_factor = 2.0 / (n_elem * (qp ** 0.5))   # s = sum(|x|) * 2 / (N * sqrt(Qp))
    s11 = pl.pallas_call(
        functools.partial(_scale_kernel, scale_factor=scale_factor),
        out_shape=jax.ShapeDtypeStruct((1, 1), jnp.float32),
        grid=(num_tiles,),
        in_specs=[pl.BlockSpec((tile_rows, _LANES), lambda i: (i, 0))],
        out_specs=pl.BlockSpec(memory_space=pltpu.MemorySpace.SMEM),
        compiler_params=pltpu.CompilerParams(
            dimension_semantics=("arbitrary",)),
    )(x2d)

    # ---- Pass 2: elementwise quantize (memory-bound, parallel across cores) ----
    out2d = pl.pallas_call(
        functools.partial(_apply_kernel, qn=qn, qp=qp),
        out_shape=jax.ShapeDtypeStruct((rows_padded, _LANES), jnp.float32),
        grid=(num_tiles,),
        in_specs=[pl.BlockSpec(memory_space=pltpu.MemorySpace.SMEM),
                  pl.BlockSpec((tile_rows, _LANES), lambda i: (i, 0))],
        out_specs=pl.BlockSpec((tile_rows, _LANES), lambda i: (i, 0)),
        input_output_aliases={1: 0},              # reuse the input HBM buffer
        compiler_params=pltpu.CompilerParams(
            dimension_semantics=("parallel",)),
    )(s11, x2d)

    vhat = out2d.reshape(-1)[:n_elem].reshape(orig_shape)
    return vhat, s11[0, 0]


def _quantizer_ref(v, p=4, is_act=False):
    """Pure-JAX mirror of the PyTorch forward (true divide, like torch)."""
    if is_act:
        qn, qp = 0, 2 ** p - 1
    else:
        qn, qp = -(2 ** (p - 1)), 2 ** (p - 1) - 1
    s = jnp.mean(jnp.abs(v)) * 2.0 / (qp ** 0.5)
    return jnp.round(jnp.clip(v / s, qn, qp)) * s


if __name__ == "__main__":
    # 4-bit weight quantizer (isAct=False) -> Qn = -8, Qp = 7.
    p, is_act = 4, False
    qp = 2 ** (p - 1) - 1

    key = jax.random.PRNGKey(0)
    x = jax.random.normal(key, (2, 4, 16, 16), dtype=jnp.float32)   # NCHW

    out, s_kernel = quantizer_forward(x, p=p, is_act=is_act)
    out = jax.block_until_ready(out)

    assert out.shape == x.shape and out.dtype == jnp.float32

    # Step size must match mean(|x|) * 2 / sqrt(Qp).
    s_formula = float(jnp.mean(jnp.abs(x)) * 2.0 / (qp ** 0.5))
    s_val = float(s_kernel)
    assert abs(s_val - s_formula) <= 1e-5 * abs(s_formula) + 1e-8, "step size mismatch"

    # Elementwise check vs the PyTorch-faithful reference. The kernel multiplies by a
    # hoisted reciprocal instead of dividing, so an input lying within ~1 ulp of a
    # round-half boundary could legitimately land exactly one quantization step away;
    # bound every element by one step and require (essentially) all to match exactly.
    ref = _quantizer_ref(x, p=p, is_act=is_act)
    err = jnp.abs(out - ref)
    assert bool(jnp.all(err <= s_val * 1.001 + 1e-5)), "error exceeds one quant step"
    n_loose = int(jnp.sum(err > 1e-5))
    assert n_loose <= max(2, x.size // 1000), f"{n_loose} non-boundary mismatches"

    print("KERNEL_OK")
</pallas_src>

<mosaic_0001>
module attributes {stable_mosaic.version = 11 : i64} {
  func.func @_apply_kernel(%arg0: i32, %arg1: memref<1x1xf32, #tpu.memory_space<smem>>, %arg2: memref<16x128xf32, #tpu.memory_space<vmem>>, %arg3: memref<16x128xf32, #tpu.memory_space<vmem>>) attributes {dimension_semantics = [#tpu.dimension_semantics<parallel>], iteration_bounds = array<i64: 1>, scalar_prefetch = 0 : i64, scratch_operands = 0 : i64, tpu.core_type = #tpu.core_type<tc>, window_params = [{transform_indices = @transform_0, window_bounds = array<i64: 1, 1>}, {transform_indices = @transform_1, window_bounds = array<i64: 16, 128>}, {transform_indices = @transform_2, window_bounds = array<i64: 16, 128>}]} {
    %c0 = arith.constant 0 : index
    %c0_0 = arith.constant 0 : index
    %0 = memref.load %arg1[%c0, %c0_0] : memref<1x1xf32, #tpu.memory_space<smem>>
    %cst = arith.constant 1.000000e+00 : f32
    %1 = arith.divf %cst, %0 : f32
    %c0_1 = arith.constant 0 : index
    %c0_2 = arith.constant 0 : index
    %2 = vector.load %arg2[%c0_1, %c0_2] : memref<16x128xf32, #tpu.memory_space<vmem>>, vector<16x128xf32>
    %3 = vector.broadcast %1 : f32 to vector<16x128xf32>
    %4 = arith.mulf %2, %3 : vector<16x128xf32>
    %cst_3 = arith.constant -8.000000e+00 : f32
    %cst_4 = arith.constant 7.000000e+00 : f32
    %5 = vector.broadcast %cst_3 : f32 to vector<16x128xf32>
    %6 = arith.maximumf %5, %4 : vector<16x128xf32>
    %7 = vector.broadcast %cst_4 : f32 to vector<16x128xf32>
    %8 = arith.minimumf %7, %6 : vector<16x128xf32>
    %9 = math.roundeven %8 : vector<16x128xf32>
    %10 = vector.broadcast %0 : f32 to vector<16x128xf32>
    %11 = arith.mulf %9, %10 : vector<16x128xf32>
    %c0_5 = arith.constant 0 : index
    %c0_6 = arith.constant 0 : index
    %12 = vector.load %arg3[%c0_5, %c0_6] : memref<16x128xf32, #tpu.memory_space<vmem>>, vector<16x128xf32>
    tpu.vector_store %arg3[%c0_5, %c0_6], %11 {strides = array<i32>} : memref<16x128xf32, #tpu.memory_space<vmem>>, vector<16x128xf32>,
    return
  }
  func.func @transform_0(%arg0: i32) -> (i32, i32) {
    %c0_i32 = arith.constant 0 : i32
    %c0_i32_0 = arith.constant 0 : i32
    %c0_i32_1 = arith.constant 0 : i32
    return %c0_i32, %c0_i32_0 : i32, i32
  }
  func.func @transform_1(%arg0: i32) -> (i32, i32) {
    %c0_i32 = arith.constant 0 : i32
    %c0_i32_0 = arith.constant 0 : i32
    return %arg0, %c0_i32 : i32, i32
  }
  func.func @transform_2(%arg0: i32) -> (i32, i32) {
    %c0_i32 = arith.constant 0 : i32
    %c0_i32_0 = arith.constant 0 : i32
    return %arg0, %c0_i32 : i32, i32
  }
}

module attributes {stable_mosaic.version = 11 : i64} {
  func.func @_scale_kernel(%arg0: i32, %arg1: memref<16x128xf32, #tpu.memory_space<vmem>>, %arg2: memref<1x1xf32, #tpu.memory_space<smem>>) attributes {dimension_semantics = [#tpu.dimension_semantics<arbitrary>], iteration_bounds = array<i64: 1>, scalar_prefetch = 0 : i64, scratch_operands = 0 : i64, tpu.core_type = #tpu.core_type<tc>, window_params = [{transform_indices = @transform_0, window_bounds = array<i64: 16, 128>}, {transform_indices = @transform_1, window_bounds = array<i64: 1, 1>}]} {
    %c0_i32 = arith.constant 0 : i32
    %0 = arith.cmpi eq, %arg0, %c0_i32 : i32
    %1 = arith.extui %0 : i1 to i32
    %c0_i32_0 = arith.constant 0 : i32
    %2 = arith.cmpi ne, %1, %c0_i32_0 : i32
    scf.if %2 {
      %cst_8 = arith.constant 0.000000e+00 : f32
      %c0_9 = arith.constant 0 : index
      %c0_10 = arith.constant 0 : index
      %15 = memref.load %arg2[%c0_9, %c0_10] : memref<1x1xf32, #tpu.memory_space<smem>>
      memref.store %cst_8, %arg2[%c0_9, %c0_10] : memref<1x1xf32, #tpu.memory_space<smem>>
    } else {
    }
    %c0 = arith.constant 0 : index
    %c0_1 = arith.constant 0 : index
    %3 = memref.load %arg2[%c0, %c0_1] : memref<1x1xf32, #tpu.memory_space<smem>>
    %c0_2 = arith.constant 0 : index
    %c0_3 = arith.constant 0 : index
    %4 = vector.load %arg1[%c0_2, %c0_3] : memref<16x128xf32, #tpu.memory_space<vmem>>, vector<16x128xf32>
    %5 = math.absf %4 : vector<16x128xf32>
    %6 = vector.shape_cast %5 : vector<16x128xf32> to vector<1x16x128xf32>
    %cst = arith.constant dense<0.000000e+00> : vector<1xf32>
    %7 = vector.multi_reduction <add>, %6, %cst [1, 2] : vector<1x16x128xf32> to vector<1xf32>
    %8 = vector.shape_cast %7 : vector<1xf32> to vector<1x1x1xf32>
    %9 = vector.extract %8[0, 0, 0] : f32 from vector<1x1x1xf32>
    %10 = arith.addf %3, %9 : f32
    %c0_4 = arith.constant 0 : index
    %c0_5 = arith.constant 0 : index
    %11 = memref.load %arg2[%c0_4, %c0_5] : memref<1x1xf32, #tpu.memory_space<smem>>
    memref.store %10, %arg2[%c0_4, %c0_5] : memref<1x1xf32, #tpu.memory_space<smem>>
    %c0_i32_6 = arith.constant 0 : i32
    %12 = arith.cmpi eq, %arg0, %c0_i32_6 : i32
    %13 = arith.extui %12 : i1 to i32
    %c0_i32_7 = arith.constant 0 : i32
    %14 = arith.cmpi ne, %13, %c0_i32_7 : i32
    scf.if %14 {
      %c0_8 = arith.constant 0 : index
      %c0_9 = arith.constant 0 : index
      %15 = memref.load %arg2[%c0_8, %c0_9] : memref<1x1xf32, #tpu.memory_space<smem>>
      %cst_10 = arith.constant 3.69105925E-4 : f32
      %16 = arith.mulf %15, %cst_10 : f32
      %c0_11 = arith.constant 0 : index
      %c0_12 = arith.constant 0 : index
      %17 = memref.load %arg2[%c0_11, %c0_12] : memref<1x1xf32, #tpu.memory_space<smem>>
      memref.store %16, %arg2[%c0_11, %c0_12] : memref<1x1xf32, #tpu.memory_space<smem>>
    } else {
    }
    return
  }
  func.func @transform_0(%arg0: i32) -> (i32, i32) {
    %c0_i32 = arith.constant 0 : i32
    %c0_i32_0 = arith.constant 0 : i32
    return %arg0, %c0_i32 : i32, i32
  }
  func.func @transform_1(%arg0: i32) -> (i32, i32) {
    %c0_i32 = arith.constant 0 : i32
    %c0_i32_0 = arith.constant 0 : i32
    %c0_i32_1 = arith.constant 0 : i32
    return %c0_i32, %c0_i32_0 : i32, i32
  }
}

</mosaic_0001>

<llo_original>
// kernel: quantizer_forward.3
$region0: #{quantizer_forward.3}
  #allocation0 [shape = 'u32[]', space=smem, size = 0x4, offset = 0x4, fixed_abs, tag = 'smem constant byte address 0x4 - core index']
  #allocation1 [shape = 'u32[144,128]{1,0:T(1,128)}', space=vmem, size = 0x12000, scoped, tag = 'internal scratch']
  #allocation2 [shape = 'f32[1,1]{1,0:T(1,128)S(6)}', space=smem, size = 0x200, scoped, tag = 'scoped memory for quantizer_forward.3']
  %s0 = inlined_call_operand.<no memory space> [shape: f32[1,1], index: 0, kind: input, shape index: {}]
  %s1 = inlined_call_operand.vmem [shape: f32[16,128], index: 1, kind: input, shape index: {}, may-alias: {1,2}]
  %s2 = inlined_call_operand.vmem [shape: f32[16,128], index: 2, kind: output, shape index: {}, may-alias: {1,2}]
  %s3 = sld [smem:[#allocation0]]
  $region18: #{quantizer_forward.3} parent=0
    _
  %s5 = ssub.s32 1, %s3
  %s6 = scalar_select 0, %s5, %s3
  %7 = sst [smem:[#allocation2]] %s0
  // Predicated region
  $region2: #{quantizer_forward.3} parent=0 // pred_check
    _
  $region3: #{quantizer_forward.3} parent=0 // pred_check_branch
    %9 = sbr.rel (0) target = $region5
  $region4: #{quantizer_forward.3} parent=0 // pred_region
    _
  $region5: #{quantizer_forward.3} parent=0 // pred_fallthru
    _
  // Predicated region
  $region6: #{quantizer_forward.3} parent=0 // pred_check
    _
  $region7: #{quantizer_forward.3} parent=0 // pred_check_branch
    %11 = sbr.rel (0) target = $region9
  $region8: #{quantizer_forward.3} parent=0 // pred_region
    _
  $region9: #{quantizer_forward.3} parent=0 // pred_fallthru
    _
  %s12 = sld [smem:[#allocation2]]
  %v13 = vstv %s12
  %v14 = vrcp.pop %v13
  %s15 = vtos %v14
  %v16 = vld [vmem:[%s1] sm:$0xff]
  %v17 = vld [vmem:[%s1 + $0x8] sm:$0xff]
  %v18 = vstv %s15
  %v19 = vmul.f32 %v16, %v18
  %v20 = vmul.f32 %v17, %v18
  %v21 = vmax.f32 %v19, -8.0
  %v22 = vmax.f32 %v20, -8.0
  %v23 = vmin.f32 %v21, 7.0
  %v24 = vmin.f32 %v22, 7.0
  %v25 = vround.ne.pseudo %v23
  %v26 = vround.ne.pseudo %v24
  %v27 = vstv %s12
  %v28 = vmul.f32 %v25, %v27
  %v29 = vmul.f32 %v26, %v27
  %30 = vst [vmem:[%s2] sm:$0xff] %v28
  %31 = vst [vmem:[%s2 + $0x8] sm:$0xff] %v29
  // Predicated region
  $region10: #{quantizer_forward.3} parent=0 // pred_check
    _
  $region11: #{quantizer_forward.3} parent=0 // pred_check_branch
    %33 = sbr.rel (0) target = $region13
  $region12: #{quantizer_forward.3} parent=0 // pred_region
    _
  $region13: #{quantizer_forward.3} parent=0 // pred_fallthru
    _
  // Predicated region
  $region14: #{quantizer_forward.3} parent=0 // pred_check
    _
  $region15: #{quantizer_forward.3} parent=0 // pred_check_branch
    %35 = sbr.rel (0) target = $region17
  $region16: #{quantizer_forward.3} parent=0 // pred_region
    _
  $region17: #{quantizer_forward.3} parent=0 // pred_fallthru
    _

// kernel: quantizer_forward.2
$region0: #{quantizer_forward.2}
  #allocation0 [shape = 'u32[]', space=smem, size = 0x4, offset = 0x4, fixed_abs, tag = 'smem constant byte address 0x4 - core index']
  #allocation1 [shape = 'u32[144,128]{1,0:T(1,128)}', space=vmem, size = 0x12000, scoped, tag = 'internal scratch']
  %s0 = inlined_call_operand.vmem [shape: f32[16,128], index: 0, kind: input, shape index: {}]
  %s1 = inlined_call_operand.hbm [shape: f32[1,1], index: 1, kind: output, shape index: {}]
  %s2 = sld [smem:[#allocation0]]
  $region22: #{quantizer_forward.2} parent=0
    _
  %s4 = ssub.s32 1, %s2
  %s5 = scalar_select 0, %s4, %s2
  $region1: #{quantizer_forward.2} parent=0
    #allocation2 [shape = 'u8[512]{0}', space=smem, size = 0x200, scoped, tag = 'output window, operand 0, single buffered']
    #allocation3 [shape = 's32[1]{0}', space=sflag, size = 0x4, scoped, tag = 'scoped memory for quantizer_forward.2']
    %6 = vsyncpa [#allocation3], 0
    // Predicated region
    $region2: #{quantizer_forward.2} parent=1 // pred_check
      _
    $region3: #{quantizer_forward.2} parent=1 // pred_check_branch
      %8 = sbr.rel (0) target = $region5
    $region4: #{quantizer_forward.2} parent=1 // pred_region
      _
    $region5: #{quantizer_forward.2} parent=1 // pred_fallthru
      _
    %p9 = scmp.eq.s32.totalorder 0, 0
    // Predicated region
    $region6: #{quantizer_forward.2} parent=1 // pred_check
      %p10 = pneg %p9
    $region7: #{quantizer_forward.2} parent=1 // pred_check_branch
      %12 = sbr.rel (%p10) target = $region9
    $region8: #{quantizer_forward.2} parent=1 // pred_region
      %s13 = scalar_lea.smem [#allocation2], 0
      %14 = sst [smem:[%s13]] 0.0
    $region9: #{quantizer_forward.2} parent=1 // pred_fallthru
      _
    %s15 = sld [smem:[#allocation2]]
    %v16 = vld [vmem:[%s0] sm:$0xff]
    %v17 = vld [vmem:[%s0 + $0x8] sm:$0xff]
    %v18 = vand.u32 2147483647, %v16
    %v19 = vand.u32 2147483647, %v17
    %v20 = vadd.f32 %v18, %v19
    %21 = vadd.xlane.f32.xlu0 %v20
    %v22 = vpop.xlane.xlu0 %21
    %v23 = vrot.slane %v22, 4
    %v24 = vadd.f32 %v22, %v23
    %v25 = vrot.slane %v24, 2
    %v26 = vadd.f32 %v24, %v25
    %v27 = vrot.slane %v26, 1
    %v28 = vadd.f32 %v26, %v27
    %s29 = vtos %v28
    %s30 = sadd.f32 %s15, %s29
    %s31 = scalar_lea.smem [#allocation2], 0
    %32 = sst [smem:[%s31]] %s30
    // Predicated region
    $region10: #{quantizer_forward.2} parent=1 // pred_check
      %p33 = pneg %p9
    $region11: #{quantizer_forward.2} parent=1 // pred_check_branch
      %35 = sbr.rel (%p33) target = $region13
    $region12: #{quantizer_forward.2} parent=1 // pred_region
      %s36 = sld [smem:[#allocation2]]
      %s37 = smul.f32 %s36, 0.00036910592
      %38 = sst [smem:[%s31]] %s37
    $region13: #{quantizer_forward.2} parent=1 // pred_fallthru
      _
    // Predicated region
    $region14: #{quantizer_forward.2} parent=1 // pred_check
      _
    $region15: #{quantizer_forward.2} parent=1 // pred_check_branch
      %40 = sbr.rel (0) target = $region17
    $region16: #{quantizer_forward.2} parent=1 // pred_region
      %s42 = ssub.s32 16, 16
      %43 = vsyncadd [#allocation3], %s42
      %46 = dma.smem_to_hbm [#allocation2], 16, %s1, [#allocation3]
    $region17: #{quantizer_forward.2} parent=1 // pred_fallthru
      _
    // Predicated region
    $region18: #{quantizer_forward.2} parent=1 // pred_check
      _
    $region19: #{quantizer_forward.2} parent=1 // pred_check_branch
      %48 = sbr.rel (0) target = $region21
    $region20: #{quantizer_forward.2} parent=1 // pred_region
      %49 = dma.done [#allocation3], 16
    $region21: #{quantizer_forward.2} parent=1 // pred_fallthru
      _
    %50 = sfence
    %51 = vsyncpa [#allocation3], 1

</llo_original>
